<compile_context>
chip_gen: v5e
topology: v5e:2x2
jax: 0.10.0
libtpu: 0.0.40
codegen_flags: <defaults>
</compile_context>

<pallas_src>
import functools

import jax
import jax.numpy as jnp
from jax.experimental import pallas as pl
from jax.experimental.pallas import tpu as pltpu

P = 128      # lane-padded feature width used for every layer inside the kernel
OUT_W = 8    # packed output lanes: 0:2 coord logits, 2:4 rot logits, 4:8 zero


def packing_net_kernel(x_ref, w_ref, b_ref, out_ref, *, compute_dtype):
    """x_ref  : (block_b, input_dim), original input dtype (cast in-kernel)
    w_ref  : (3*P + in_pad, P) compute dtype -- packed weight slab
             rows [0,P)        : W2  (trunk layer 2), real rows 0:64
             rows [P,2P)       : Wh1 (fused head layer 1), real cols 0:48
             rows [2P,3P)      : Wh2 (block-diag fused head layer 2), cols 0:4
             rows [3P,3P+in)   : W1  (trunk layer 1)
    b_ref  : (4, P) float32 -- rows: b1, b2, bh1(fused), bh2(fused), zero pad
    out_ref: (block_b, OUT_W) float32 -- raw logits (sigmoid done in wrapper)
    """
    in_dim = x_ref.shape[-1]

    x = x_ref[...].astype(compute_dtype)      # in-kernel cast (hidden under MXU)
    b = b_ref[...]                             # (4, P) f32

    w1 = w_ref[3 * P:3 * P + in_dim, :]        # (in_dim, P), 8-aligned start
    w2 = w_ref[0:P, :]                         # (P, P)
    wh1 = w_ref[P:2 * P, :]                    # (P, P)
    wh2 = w_ref[2 * P:3 * P, :]                # (P, P)

    # ---- shared trunk (f32 accumulate, compute-dtype matmul operands) -------
    h = jnp.dot(x, w1, preferred_element_type=jnp.float32) + b[0:1, :]
    h = jnp.maximum(h, 0.0).astype(compute_dtype)
    h = jnp.dot(h, w2, preferred_element_type=jnp.float32) + b[1:2, :]
    h = jnp.maximum(h, 0.0).astype(compute_dtype)

    # ---- fused heads: one matmul for both first layers, one for both outputs
    hh = jnp.dot(h, wh1, preferred_element_type=jnp.float32) + b[2:3, :]
    hh = jnp.maximum(hh, 0.0).astype(compute_dtype)
    o = jnp.dot(hh, wh2, preferred_element_type=jnp.float32) + b[3:4, :]

    # Packed output: only the 8 real/padded lanes hit HBM (32 B/row).
    out_ref[...] = o[:, 0:OUT_W]


def _pack_params(params, input_dim, compute_dtype):
    """Pack the 12 PackingNet parameters into one weight slab + one bias slab."""
    in_pad = ((input_dim + 7) // 8) * 8   # keep W1 block sublane-aligned

    def pad2d(a, rows, cols):
        out = jnp.zeros((rows, cols), jnp.float32)
        return out.at[: a.shape[0], : a.shape[1]].set(a.astype(jnp.float32))

    w1 = pad2d(params["w1"], in_pad, P)                           # (in_pad, P)
    w2 = pad2d(params["w2"], P, P)                                # (P, P)
    wh1 = pad2d(jnp.concatenate([params["wc1"], params["wr1"]], axis=1), P, P)
    wh2_small = jnp.zeros((48, 4), jnp.float32)
    wh2_small = wh2_small.at[0:32, 0:2].set(params["wc2"])
    wh2_small = wh2_small.at[32:48, 2:4].set(params["wr2"])
    wh2 = pad2d(wh2_small, P, P)

    # Fixed-size 128-row blocks first so every in-kernel slice start is aligned.
    w_slab = jnp.concatenate([w2, wh1, wh2, w1], axis=0).astype(compute_dtype)

    b_slab = jnp.zeros((4, P), jnp.float32)
    b_slab = b_slab.at[0, :64].set(params["b1"][0])
    b_slab = b_slab.at[1, :64].set(params["b2"][0])
    b_slab = b_slab.at[2, :48].set(
        jnp.concatenate([params["bc1"][0], params["br1"][0]]))
    b_slab = b_slab.at[3, :4].set(
        jnp.concatenate([params["bc2"][0], params["br2"][0]]))
    return w_slab, b_slab


def _tpu_budget():
    """(max_block, vmem_limit_bytes) per TPU generation."""
    try:
        cap = int(getattr(pltpu.get_tpu_info(), "vmem_capacity_bytes", 64 << 20))
    except Exception:
        cap = 64 << 20
    if cap >= (100 << 20):        # v5e / v6e: 128 MiB physical VMEM
        return 8192, 64 << 20
    return 4096, 40 << 20         # v7x: 64 MiB physical VMEM -> smaller tiles


def _choose_block(batch, max_block):
    """Pick (block_b, grid_steps). Small batches: one block (dims == array dims,
    no padding needed). Large batches: an EVEN number of 8-aligned blocks so the
    'parallel' axis balances across both TensorCores on v7x; the trailing block
    may be partial (Pallas masks OOB reads/writes; rows are independent)."""
    if batch <= 512:
        return batch, 1
    steps = max(2, pl.cdiv(batch, max_block))
    steps = pl.cdiv(steps, 2) * 2
    block = ((pl.cdiv(batch, steps) + 7) // 8) * 8
    return block, pl.cdiv(batch, block)


def packing_net_forward(x, params, *, compute_dtype=jnp.bfloat16, max_block=None):
    """x: (B, input_dim) float32. Returns (coords (B,2) in (0,1), rot_logits (B,2)).
    Note: with the default bf16 compute path, x itself is cast to bf16 for the
    MXU (weights AND inputs reduced precision); use compute_dtype=jnp.float32
    for bit-tight results."""
    B, input_dim = x.shape
    auto_block, vmem_limit = _tpu_budget()
    if max_block is None:
        max_block = auto_block
    block_b, grid_steps = _choose_block(B, max_block)

    w_slab, b_slab = _pack_params(params, input_dim, compute_dtype)

    flops = int(2 * B * (input_dim * P + 3 * P * P))
    bytes_accessed = int(
        B * (input_dim * x.dtype.itemsize + OUT_W * 4)
        + w_slab.size * w_slab.dtype.itemsize + b_slab.size * 4)

    out = pl.pallas_call(
        functools.partial(packing_net_kernel, compute_dtype=compute_dtype),
        grid=(grid_steps,),
        in_specs=[
            pl.BlockSpec((block_b, input_dim), lambda i: (i, 0)),
            pl.BlockSpec(w_slab.shape, lambda i: (0, 0)),   # resident weights
            pl.BlockSpec(b_slab.shape, lambda i: (0, 0)),   # resident biases
        ],
        out_specs=pl.BlockSpec((block_b, OUT_W), lambda i: (i, 0)),
        out_shape=jax.ShapeDtypeStruct((B, OUT_W), jnp.float32),
        compiler_params=pltpu.CompilerParams(
            dimension_semantics=("parallel",),
            vmem_limit_bytes=int(vmem_limit)),
        cost_estimate=pl.CostEstimate(
            flops=flops, transcendentals=0, bytes_accessed=bytes_accessed),
    )(x, w_slab, b_slab)

    # Sigmoid on the tiny (B,2) coord slice (fused by XLA; keeps EUP work out
    # of the kernel). Rot logits pass through raw, matching the reference.
    coords = jax.nn.sigmoid(out[:, 0:2])
    rot = out[:, 2:4]
    return coords, rot


def init_params(key, input_dim):
    """Deterministic synthetic params. Weights are (in_features, out_features)."""
    dims = [
        ("w1", "b1", input_dim, 64),
        ("w2", "b2", 64, 64),
        ("wc1", "bc1", 64, 32),
        ("wc2", "bc2", 32, 2),
        ("wr1", "br1", 64, 16),
        ("wr2", "br2", 16, 2),
    ]
    params = {}
    for wname, bname, fan_in, fan_out in dims:
        key, kw, kb = jax.random.split(key, 3)
        bound = 1.0 / jnp.sqrt(jnp.float32(fan_in))
        params[wname] = jax.random.uniform(
            kw, (fan_in, fan_out), jnp.float32, -bound, bound)
        params[bname] = jax.random.uniform(
            kb, (1, fan_out), jnp.float32, -bound, bound)
    return params


def reference_forward(x, params):
    """Pure-JAX f32 reference of PackingNet.forward."""
    h = jnp.maximum(x @ params["w1"] + params["b1"], 0.0)
    h = jnp.maximum(h @ params["w2"] + params["b2"], 0.0)
    c = jnp.maximum(h @ params["wc1"] + params["bc1"], 0.0)
    coords = jax.nn.sigmoid(c @ params["wc2"] + params["bc2"])
    r = jnp.maximum(h @ params["wr1"] + params["br1"], 0.0)
    rot = r @ params["wr2"] + params["br2"]
    return coords, rot


if __name__ == "__main__":
    key = jax.random.PRNGKey(0)
    k_x, k_p, k_x2, k_x3 = jax.random.split(key, 4)

    batch = 8
    input_dim = 32  # PackingNet(input_dim=32)

    x = jax.random.normal(k_x, (batch, input_dim), jnp.float32)
    params = init_params(k_p, input_dim)
    ref_coords, ref_rot = reference_forward(x, params)

    # --- f32 path: tight numerical check ---------------------------------
    coords32, rot32 = packing_net_forward(x, params, compute_dtype=jnp.float32)
    coords32, rot32 = jax.block_until_ready((coords32, rot32))
    assert coords32.shape == (batch, 2) and rot32.shape == (batch, 2)
    assert jnp.allclose(coords32, ref_coords, atol=1e-4, rtol=1e-4)
    assert jnp.allclose(rot32, ref_rot, atol=1e-4, rtol=1e-4)

    # --- bf16 path (default, perf mode): relaxed tolerance ----------------
    coords_bf, rot_bf = packing_net_forward(x, params)  # compute_dtype=bf16
    coords_bf, rot_bf = jax.block_until_ready((coords_bf, rot_bf))
    assert jnp.allclose(coords_bf, ref_coords, atol=5e-2, rtol=5e-2)
    assert jnp.allclose(rot_bf, ref_rot, atol=5e-2, rtol=5e-2)

    # --- larger batch: multi-block grid with a partial trailing block -----
    big_b = 1000
    x_big = jax.random.normal(k_x2, (big_b, input_dim), jnp.float32)
    cb, rb = packing_net_forward(x_big, params, max_block=512)  # force 2 blocks
    cb, rb = jax.block_until_ready((cb, rb))
    rc, rr = reference_forward(x_big, params)
    assert cb.shape == (big_b, 2) and rb.shape == (big_b, 2)
    assert jnp.allclose(cb, rc, atol=5e-2, rtol=5e-2)
    assert jnp.allclose(rb, rr, atol=5e-2, rtol=5e-2)

    # --- odd batch: single block whose dims equal the array dims ----------
    odd_b = 37
    x_odd = jax.random.normal(k_x3, (odd_b, input_dim), jnp.float32)
    co, ro = packing_net_forward(x_odd, params)
    co, ro = jax.block_until_ready((co, ro))
    rco, rro = reference_forward(x_odd, params)
    assert jnp.allclose(co, rco, atol=5e-2, rtol=5e-2)
    assert jnp.allclose(ro, rro, atol=5e-2, rtol=5e-2)

    print("KERNEL_OK")
</pallas_src>

<mosaic_0001>
module attributes {stable_mosaic.version = 11 : i64} {
  func.func @packing_net_kernel(%arg0: i32, %arg1: memref<8x32xf32, #tpu.memory_space<vmem>>, %arg2: memref<416x128xf32, #tpu.memory_space<vmem>>, %arg3: memref<4x128xf32, #tpu.memory_space<vmem>>, %arg4: memref<8x8xf32, #tpu.memory_space<vmem>>) attributes {dimension_semantics = [#tpu.dimension_semantics<parallel>], iteration_bounds = array<i64: 1>, scalar_prefetch = 0 : i64, scratch_operands = 0 : i64, tpu.core_type = #tpu.core_type<tc>, window_params = [{transform_indices = @transform_0, window_bounds = array<i64: 8, 32>}, {pipeline_mode = #tpu.pipeline_mode<synchronous>, transform_indices = @transform_1, window_bounds = array<i64: 416, 128>}, {pipeline_mode = #tpu.pipeline_mode<synchronous>, transform_indices = @transform_2, window_bounds = array<i64: 4, 128>}, {transform_indices = @transform_3, window_bounds = array<i64: 8, 8>}]} {
    %c0 = arith.constant 0 : index
    %c0_0 = arith.constant 0 : index
    %0 = vector.load %arg1[%c0, %c0_0] : memref<8x32xf32, #tpu.memory_space<vmem>>, vector<8x32xf32>
    %c0_1 = arith.constant 0 : index
    %c0_2 = arith.constant 0 : index
    %1 = vector.load %arg3[%c0_1, %c0_2] : memref<4x128xf32, #tpu.memory_space<vmem>>, vector<4x128xf32>
    %c384 = arith.constant 384 : index
    %c0_3 = arith.constant 0 : index
    %2 = vector.load %arg2[%c384, %c0_3] : memref<416x128xf32, #tpu.memory_space<vmem>>, vector<32x128xf32>
    %c0_4 = arith.constant 0 : index
    %c0_5 = arith.constant 0 : index
    %3 = vector.load %arg2[%c0_4, %c0_5] : memref<416x128xf32, #tpu.memory_space<vmem>>, vector<128x128xf32>
    %c128 = arith.constant 128 : index
    %c0_6 = arith.constant 0 : index
    %4 = vector.load %arg2[%c128, %c0_6] : memref<416x128xf32, #tpu.memory_space<vmem>>, vector<128x128xf32>
    %c256 = arith.constant 256 : index
    %c0_7 = arith.constant 0 : index
    %5 = vector.load %arg2[%c256, %c0_7] : memref<416x128xf32, #tpu.memory_space<vmem>>, vector<128x128xf32>
    %cst = arith.constant dense<0.000000e+00> : vector<8x128xf32>
    %6 = tpu.matmul %0, %2, %cst {dimension_numbers = #tpu.dot_dimension_numbers<[1], [0], [0], [1], [0, 0, 1, 1], [], []>} : vector<8x32xf32>, vector<32x128xf32>, vector<8x128xf32> -> vector<8x128xf32>
    %7 = vector.extract_strided_slice %1 {offsets = [0, 0], sizes = [1, 128], strides = [1, 1]} : vector<4x128xf32> to vector<1x128xf32>
    %8 = vector.broadcast %7 : vector<1x128xf32> to vector<8x128xf32>
    %9 = arith.addf %6, %8 : vector<8x128xf32>
    %cst_8 = arith.constant 0.000000e+00 : f32
    %10 = vector.broadcast %cst_8 : f32 to vector<8x128xf32>
    %11 = arith.maximumf %9, %10 : vector<8x128xf32>
    %cst_9 = arith.constant dense<0.000000e+00> : vector<8x128xf32>
    %12 = tpu.matmul %11, %3, %cst_9 {dimension_numbers = #tpu.dot_dimension_numbers<[1], [0], [0], [1], [0, 0, 1, 1], [], []>} : vector<8x128xf32>, vector<128x128xf32>, vector<8x128xf32> -> vector<8x128xf32>
    %13 = vector.extract_strided_slice %1 {offsets = [1, 0], sizes = [1, 128], strides = [1, 1]} : vector<4x128xf32> to vector<1x128xf32>
    %14 = vector.broadcast %13 : vector<1x128xf32> to vector<8x128xf32>
    %15 = arith.addf %12, %14 : vector<8x128xf32>
    %cst_10 = arith.constant 0.000000e+00 : f32
    %16 = vector.broadcast %cst_10 : f32 to vector<8x128xf32>
    %17 = arith.maximumf %15, %16 : vector<8x128xf32>
    %cst_11 = arith.constant dense<0.000000e+00> : vector<8x128xf32>
    %18 = tpu.matmul %17, %4, %cst_11 {dimension_numbers = #tpu.dot_dimension_numbers<[1], [0], [0], [1], [0, 0, 1, 1], [], []>} : vector<8x128xf32>, vector<128x128xf32>, vector<8x128xf32> -> vector<8x128xf32>
    %19 = vector.extract_strided_slice %1 {offsets = [2, 0], sizes = [1, 128], strides = [1, 1]} : vector<4x128xf32> to vector<1x128xf32>
    %20 = vector.broadcast %19 : vector<1x128xf32> to vector<8x128xf32>
    %21 = arith.addf %18, %20 : vector<8x128xf32>
    %cst_12 = arith.constant 0.000000e+00 : f32
    %22 = vector.broadcast %cst_12 : f32 to vector<8x128xf32>
    %23 = arith.maximumf %21, %22 : vector<8x128xf32>
    %cst_13 = arith.constant dense<0.000000e+00> : vector<8x128xf32>
    %24 = tpu.matmul %23, %5, %cst_13 {dimension_numbers = #tpu.dot_dimension_numbers<[1], [0], [0], [1], [0, 0, 1, 1], [], []>} : vector<8x128xf32>, vector<128x128xf32>, vector<8x128xf32> -> vector<8x128xf32>
    %25 = vector.extract_strided_slice %1 {offsets = [3, 0], sizes = [1, 128], strides = [1, 1]} : vector<4x128xf32> to vector<1x128xf32>
    %26 = vector.broadcast %25 : vector<1x128xf32> to vector<8x128xf32>
    %27 = arith.addf %24, %26 : vector<8x128xf32>
    %28 = vector.extract_strided_slice %27 {offsets = [0, 0], sizes = [8, 8], strides = [1, 1]} : vector<8x128xf32> to vector<8x8xf32>
    %c0_14 = arith.constant 0 : index
    %c0_15 = arith.constant 0 : index
    %29 = vector.load %arg4[%c0_14, %c0_15] : memref<8x8xf32, #tpu.memory_space<vmem>>, vector<8x8xf32>
    tpu.vector_store %arg4[%c0_14, %c0_15], %28 {strides = array<i32>} : memref<8x8xf32, #tpu.memory_space<vmem>>, vector<8x8xf32>,
    return
  }
  func.func @transform_0(%arg0: i32) -> (i32, i32) {
    %c0_i32 = arith.constant 0 : i32
    %c0_i32_0 = arith.constant 0 : i32
    return %arg0, %c0_i32 : i32, i32
  }
  func.func @transform_1(%arg0: i32) -> (i32, i32) {
    %c0_i32 = arith.constant 0 : i32
    %c0_i32_0 = arith.constant 0 : i32
    %c0_i32_1 = arith.constant 0 : i32
    return %c0_i32, %c0_i32_0 : i32, i32
  }
  func.func @transform_2(%arg0: i32) -> (i32, i32) {
    %c0_i32 = arith.constant 0 : i32
    %c0_i32_0 = arith.constant 0 : i32
    %c0_i32_1 = arith.constant 0 : i32
    return %c0_i32, %c0_i32_0 : i32, i32
  }
  func.func @transform_3(%arg0: i32) -> (i32, i32) {
    %c0_i32 = arith.constant 0 : i32
    %c0_i32_0 = arith.constant 0 : i32
    return %arg0, %c0_i32 : i32, i32
  }
}

</mosaic_0001>

<llo_original>
// kernel: tpu_custom_call.1
$region0: #{tpu_custom_call.1}
  #allocation0 [shape = 'u32[]', space=smem, size = 0x4, offset = 0x4, fixed_abs, tag = 'smem constant byte address 0x4 - core index']
  #allocation1 [shape = 'u32[72,128]{1,0:T(1,128)}', space=vmem, size = 0x9000, scoped, tag = 'internal scratch']
  %s0 = inlined_call_operand.hbm [shape: f32[8,32], index: 0, kind: input, shape index: {}]
  %s1 = inlined_call_operand.hbm [shape: f32[416,128], index: 1, kind: input, shape index: {}]
  %s2 = inlined_call_operand.hbm [shape: f32[4,128], index: 2, kind: input, shape index: {}]
  %s3 = inlined_call_operand.hbm [shape: f32[8,8], index: 3, kind: output, shape index: {}]
  %s4 = sld [smem:[#allocation0]]
  $region34: #{tpu_custom_call.1} parent=0
    _
  %s6 = ssub.s32 1, %s4
  %s7 = scalar_select 0, %s6, %s4
  $region1: #{tpu_custom_call.1} parent=0
    #allocation2 [shape = 'u8[4096]{0}', space=vmem, size = 0x1000, scoped, tag = 'input window, operand 0, single buffered']
    #allocation3 [shape = 's32[1]{0}', space=sflag, size = 0x4, scoped, tag = 'scoped memory for tpu_custom_call.1']
    #allocation4 [shape = 's32[1]{0}', space=sflag, size = 0x4, scoped, tag = 'scoped memory for tpu_custom_call.1']
    #allocation5 [shape = 'u8[212992]{0}', space=vmem, size = 0x34000, scoped, tag = 'input window, operand 1, single buffered']
    #allocation6 [shape = 's32[1]{0}', space=sflag, size = 0x4, scoped, tag = 'scoped memory for tpu_custom_call.1']
    #allocation7 [shape = 'u8[2048]{0}', space=vmem, size = 0x800, scoped, tag = 'input window, operand 2, single buffered']
    #allocation8 [shape = 'u8[4096]{0}', space=vmem, size = 0x1000, scoped, tag = 'output window, operand 0, single buffered']
    %8 = vsyncpa [#allocation3], 0
    %9 = vsyncpa [#allocation6], 0
    %10 = vsyncpa [#allocation4], 0
    // Predicated region
    $region2: #{tpu_custom_call.1} parent=1 // pred_check
      _
    $region3: #{tpu_custom_call.1} parent=1 // pred_check_branch
      %12 = sbr.rel (0) target = $region5
    $region4: #{tpu_custom_call.1} parent=1 // pred_region
      %14 = vsyncadd [#allocation3], 0
      %s16 = sshll.u32 %s0, 4
      %s17 = int_to_ptr.hbm [resolvable:$true] %s16
      %s18 = sshll.u32 [#allocation2], 4
      %s19 = int_to_ptr.vmem [resolvable:$true] %s18
      %21 = dma.hbm_to_vmem [thread:$0]  %s17, 128, %s19, [#allocation3]
    $region5: #{tpu_custom_call.1} parent=1 // pred_fallthru
      _
    // Predicated region
    $region6: #{tpu_custom_call.1} parent=1 // pred_check
      _
    $region7: #{tpu_custom_call.1} parent=1 // pred_check_branch
      %23 = sbr.rel (0) target = $region9
    $region8: #{tpu_custom_call.1} parent=1 // pred_region
      %25 = vsyncadd [#allocation6], 0
      %s26 = sshll.u32 %s1, 4
      %s27 = int_to_ptr.hbm [resolvable:$true] %s26
      %s28 = sshll.u32 [#allocation5], 4
      %s29 = int_to_ptr.vmem [resolvable:$true] %s28
      %34 = dma.hbm_to_vmem [thread:$0]  %s27, 6656, %s29, [#allocation6], 128, 128, 8
    $region9: #{tpu_custom_call.1} parent=1 // pred_fallthru
      _
    // Predicated region
    $region10: #{tpu_custom_call.1} parent=1 // pred_check
      _
    $region11: #{tpu_custom_call.1} parent=1 // pred_check_branch
      %36 = sbr.rel (0) target = $region13
    $region12: #{tpu_custom_call.1} parent=1 // pred_region
      %38 = vsyncadd [#allocation6], 0
      %s40 = sshll.u32 %s2, 4
      %s41 = int_to_ptr.hbm [resolvable:$true] %s40
      %s42 = sshll.u32 [#allocation7], 4
      %s43 = int_to_ptr.vmem [resolvable:$true] %s42
      %45 = dma.hbm_to_vmem [thread:$0]  %s41, 64, %s43, [#allocation6]
    $region13: #{tpu_custom_call.1} parent=1 // pred_fallthru
      _
    // Predicated region
    $region14: #{tpu_custom_call.1} parent=1 // pred_check
      _
    $region15: #{tpu_custom_call.1} parent=1 // pred_check_branch
      %47 = sbr.rel (0) target = $region17
    $region16: #{tpu_custom_call.1} parent=1 // pred_region
      %49 = dma.done [#allocation3], 128
    $region17: #{tpu_custom_call.1} parent=1 // pred_fallthru
      _
    // Predicated region
    $region18: #{tpu_custom_call.1} parent=1 // pred_check
      _
    $region19: #{tpu_custom_call.1} parent=1 // pred_check_branch
      %51 = sbr.rel (0) target = $region21
    $region20: #{tpu_custom_call.1} parent=1 // pred_region
      %53 = dma.done [#allocation6], 6656
    $region21: #{tpu_custom_call.1} parent=1 // pred_fallthru
      _
    // Predicated region
    $region22: #{tpu_custom_call.1} parent=1 // pred_check
      _
    $region23: #{tpu_custom_call.1} parent=1 // pred_check_branch
      %55 = sbr.rel (0) target = $region25
    $region24: #{tpu_custom_call.1} parent=1 // pred_region
      %57 = dma.done [#allocation6], 64
    $region25: #{tpu_custom_call.1} parent=1 // pred_fallthru
      _
    %v58 = vld [vmem:[#allocation2] sm:$0xff]
    %v59 = vld [vmem:[#allocation7] sm:$0xf]
    %v60 = vld [vmem:[#allocation5 + $0x180] sm:$0xff]
    %v61 = vld [vmem:[#allocation5 + $0x188] sm:$0xff]
    %v62 = vld [vmem:[#allocation5 + $0x190] sm:$0xff]
    %v63 = vld [vmem:[#allocation5 + $0x198] sm:$0xff]
    %v64 = vld [vmem:[#allocation5] sm:$0xff]
    %v65 = vld [vmem:[#allocation5 + $0x8] sm:$0xff]
    %v66 = vld [vmem:[#allocation5 + $0x10] sm:$0xff]
    %v67 = vld [vmem:[#allocation5 + $0x18] sm:$0xff]
    %v68 = vld [vmem:[#allocation5 + $0x20] sm:$0xff]
    %v69 = vld [vmem:[#allocation5 + $0x28] sm:$0xff]
    %v70 = vld [vmem:[#allocation5 + $0x30] sm:$0xff]
    %v71 = vld [vmem:[#allocation5 + $0x38] sm:$0xff]
    %v72 = vld [vmem:[#allocation5 + $0x40] sm:$0xff]
    %v73 = vld [vmem:[#allocation5 + $0x48] sm:$0xff]
    %v74 = vld [vmem:[#allocation5 + $0x50] sm:$0xff]
    %v75 = vld [vmem:[#allocation5 + $0x58] sm:$0xff]
    %v76 = vld [vmem:[#allocation5 + $0x60] sm:$0xff]
    %v77 = vld [vmem:[#allocation5 + $0x68] sm:$0xff]
    %v78 = vld [vmem:[#allocation5 + $0x70] sm:$0xff]
    %v79 = vld [vmem:[#allocation5 + $0x78] sm:$0xff]
    %v80 = vld [vmem:[#allocation5 + $0x80] sm:$0xff]
    %v81 = vld [vmem:[#allocation5 + $0x88] sm:$0xff]
    %v82 = vld [vmem:[#allocation5 + $0x90] sm:$0xff]
    %v83 = vld [vmem:[#allocation5 + $0x98] sm:$0xff]
    %v84 = vld [vmem:[#allocation5 + $0xa0] sm:$0xff]
    %v85 = vld [vmem:[#allocation5 + $0xa8] sm:$0xff]
    %v86 = vld [vmem:[#allocation5 + $0xb0] sm:$0xff]
    %v87 = vld [vmem:[#allocation5 + $0xb8] sm:$0xff]
    %v88 = vld [vmem:[#allocation5 + $0xc0] sm:$0xff]
    %v89 = vld [vmem:[#allocation5 + $0xc8] sm:$0xff]
    %v90 = vld [vmem:[#allocation5 + $0xd0] sm:$0xff]
    %v91 = vld [vmem:[#allocation5 + $0xd8] sm:$0xff]
    %v92 = vld [vmem:[#allocation5 + $0xe0] sm:$0xff]
    %v93 = vld [vmem:[#allocation5 + $0xe8] sm:$0xff]
    %v94 = vld [vmem:[#allocation5 + $0xf0] sm:$0xff]
    %v95 = vld [vmem:[#allocation5 + $0xf8] sm:$0xff]
    %v96 = vld [vmem:[#allocation5 + $0x100] sm:$0xff]
    %v97 = vld [vmem:[#allocation5 + $0x108] sm:$0xff]
    %v98 = vld [vmem:[#allocation5 + $0x110] sm:$0xff]
    %v99 = vld [vmem:[#allocation5 + $0x118] sm:$0xff]
    %v100 = vld [vmem:[#allocation5 + $0x120] sm:$0xff]
    %v101 = vld [vmem:[#allocation5 + $0x128] sm:$0xff]
    %v102 = vld [vmem:[#allocation5 + $0x130] sm:$0xff]
    %v103 = vld [vmem:[#allocation5 + $0x138] sm:$0xff]
    %v104 = vld [vmem:[#allocation5 + $0x140] sm:$0xff]
    %v105 = vld [vmem:[#allocation5 + $0x148] sm:$0xff]
    %v106 = vld [vmem:[#allocation5 + $0x150] sm:$0xff]
    %v107 = vld [vmem:[#allocation5 + $0x158] sm:$0xff]
    %v108 = vld [vmem:[#allocation5 + $0x160] sm:$0xff]
    %v109 = vld [vmem:[#allocation5 + $0x168] sm:$0xff]
    %v110 = vld [vmem:[#allocation5 + $0x170] sm:$0xff]
    %v111 = vld [vmem:[#allocation5 + $0x178] sm:$0xff]
    %v112 = vperm.slane %v59, 0
    %vm113 = vcmask 261120
    %v115 = vsel %vm113, %v58, 0
    %117 = vmatpush.msra.mxu0 0.0
    %118 = vmatpush.msra.mxu0 0.0
    %119 = vmatpush.msra.mxu0 0.0
    %120 = vmatpush.msra.mxu0 0.0
    %121 = vmatpush.msra.mxu0 0.0
    %122 = vmatpush.msra.mxu0 0.0
    %123 = vmatpush.msra.mxu0 0.0
    %124 = vmatpush.msra.mxu0 0.0
    %125 = vmatpush.msra.mxu0 0.0
    %126 = vmatpush.msra.mxu0 0.0
    %127 = vmatpush.msra.mxu0 0.0
    %128 = vmatpush.msra.mxu0 0.0
    %129 = vmatpush.msra.mxu0 %v63
    %130 = vmatpush.msra.mxu0 %v62
    %131 = vmatpush.msra.mxu0 %v61
    %132 = vmatpush.msra.mxu0 %v60
    %133 = vmatmul.f32.gmra.mxu0 %v115
    %v134 = vpop.f32.mrf.mxu0
    %v135 = vadd.f32 %v112, %v134
    %136 = vdwg.mxu0
    %v137 = vmax.f32 %v135, 0.0
    %v138 = vperm.slane %v59, 1
    %139 = vmatpush.msra.mxu0 %v79
    %140 = vmatpush.msra.mxu0 %v78
    %141 = vmatpush.msra.mxu0 %v77
    %142 = vmatpush.msra.mxu0 %v76
    %143 = vmatpush.msra.mxu0 %v75
    %144 = vmatpush.msra.mxu0 %v74
    %145 = vmatpush.msra.mxu0 %v73
    %146 = vmatpush.msra.mxu0 %v72
    %147 = vmatpush.msra.mxu0 %v71
    %148 = vmatpush.msra.mxu0 %v70
    %149 = vmatpush.msra.mxu0 %v69
    %150 = vmatpush.msra.mxu0 %v68
    %151 = vmatpush.msra.mxu0 %v67
    %152 = vmatpush.msra.mxu0 %v66
    %153 = vmatpush.msra.mxu0 %v65
    %154 = vmatpush.msra.mxu0 %v64
    %155 = vmatmul.f32.gmra.mxu0 %v137
    %v156 = vpop.f32.mrf.mxu0
    %v157 = vadd.f32 %v138, %v156
    %158 = vdwg.mxu0
    %v159 = vmax.f32 %v157, 0.0
    %v160 = vperm.slane %v59, 2
    %161 = vmatpush.msra.mxu0 %v95
    %162 = vmatpush.msra.mxu0 %v94
    %163 = vmatpush.msra.mxu0 %v93
    %164 = vmatpush.msra.mxu0 %v92
    %165 = vmatpush.msra.mxu0 %v91
    %166 = vmatpush.msra.mxu0 %v90
    %167 = vmatpush.msra.mxu0 %v89
    %168 = vmatpush.msra.mxu0 %v88
    %169 = vmatpush.msra.mxu0 %v87
    %170 = vmatpush.msra.mxu0 %v86
    %171 = vmatpush.msra.mxu0 %v85
    %172 = vmatpush.msra.mxu0 %v84
    %173 = vmatpush.msra.mxu0 %v83
    %174 = vmatpush.msra.mxu0 %v82
    %175 = vmatpush.msra.mxu0 %v81
    %176 = vmatpush.msra.mxu0 %v80
    %177 = vmatmul.f32.gmra.mxu0 %v159
    %v178 = vpop.f32.mrf.mxu0
    %v179 = vadd.f32 %v160, %v178
    %180 = vdwg.mxu0
    %v181 = vmax.f32 %v179, 0.0
    %v182 = vperm.slane %v59, 3
    %183 = vmatpush.msra.mxu0 %v111
    %184 = vmatpush.msra.mxu0 %v110
    %185 = vmatpush.msra.mxu0 %v109
    %186 = vmatpush.msra.mxu0 %v108
    %187 = vmatpush.msra.mxu0 %v107
    %188 = vmatpush.msra.mxu0 %v106
    %189 = vmatpush.msra.mxu0 %v105
    %190 = vmatpush.msra.mxu0 %v104
    %191 = vmatpush.msra.mxu0 %v103
    %192 = vmatpush.msra.mxu0 %v102
    %193 = vmatpush.msra.mxu0 %v101
    %194 = vmatpush.msra.mxu0 %v100
    %195 = vmatpush.msra.mxu0 %v99
    %196 = vmatpush.msra.mxu0 %v98
    %197 = vmatpush.msra.mxu0 %v97
    %198 = vmatpush.msra.mxu0 %v96
    %199 = vmatmul.f32.gmra.mxu0 %v181
    %v200 = vpop.f32.mrf.mxu0
    %v201 = vadd.f32 %v182, %v200
    %202 = vdwg.mxu0
    %vm203 = vcmask 64512
    %204 = vst.msk [vmem:[#allocation8] sm:$0xff] %vm203, %v201
    // Predicated region
    $region26: #{tpu_custom_call.1} parent=1 // pred_check
      _
    $region27: #{tpu_custom_call.1} parent=1 // pred_check_branch
      %206 = sbr.rel (0) target = $region29
    $region28: #{tpu_custom_call.1} parent=1 // pred_region
      %208 = vsyncadd [#allocation4], 0
      %s210 = sshll.u32 [#allocation8], 4
      %s211 = int_to_ptr.vmem [resolvable:$true] %s210
      %s212 = sshll.u32 %s3, 4
      %s213 = int_to_ptr.hbm [resolvable:$true] %s212
      %215 = dma.vmem_to_hbm [thread:$0]  %s211, 128, %s213, [#allocation4]
    $region29: #{tpu_custom_call.1} parent=1 // pred_fallthru
      _
    // Predicated region
    $region30: #{tpu_custom_call.1} parent=1 // pred_check
      _
    $region31: #{tpu_custom_call.1} parent=1 // pred_check_branch
      %217 = sbr.rel (0) target = $region33
    $region32: #{tpu_custom_call.1} parent=1 // pred_region
      %219 = dma.done [#allocation4], 128
    $region33: #{tpu_custom_call.1} parent=1 // pred_fallthru
      _
    %220 = vsyncpa [#allocation3], 1
    %221 = vsyncpa [#allocation6], 1
    %222 = vsyncpa [#allocation4], 1

</llo_original>
